<compile_context>
chip_gen: v5e
topology: v5e:2x2
jax: 0.10.0
libtpu: 0.0.40
codegen_flags: <defaults>
</compile_context>

<pallas_src>
import jax
import jax.numpy as jnp
import numpy as np
from jax import lax
from jax.experimental import pallas as pl
from jax.experimental.pallas import tpu as pltpu

NUM_STACK = 4


def _round_up(x, m):
    return ((x + m - 1) // m) * m


def _vmem_capacity_bytes():
    try:
        return int(pltpu.get_tpu_info().vmem_capacity_bytes)
    except Exception:
        return 64 * 1024 * 1024


def _make_kernel(*, num_stack, B, F, tt, halo_rows, has_halo):
    ns = num_stack
    NSF = ns * F

    def kernel(*refs):
        if has_halo:
            lens_ref, cur_ref, halo_ref, out_ref = refs
        else:
            lens_ref, cur_ref, out_ref = refs
            halo_ref = None

        t0 = pl.program_id(0) * tt
        # One lane-dense time index per tile.  All masks below are plain
        # compares of this against SMEM scalars (no (N,1) mask arrays, no
        # broadcast_in_dim re-derived per slot).
        t_idx = lax.broadcasted_iota(jnp.int32, (tt, F), 0) + t0     # (tt, F)

        for b in range(B):
            src_b = cur_ref[:, b * F:(b + 1) * F]                    # (tt, F)
            len_b = lens_ref[b]                                      # SMEM scalar
            zero = jnp.zeros((), dtype=src_b.dtype)
            for i in range(ns):
                s = ns - 1 - i                 # backward time shift of slot i
                lo = b * NSF + i * F           # output lane offset of chunk

                # Body rows [s, tt): out[t] = seqs[t - s], dead iff t >= len_b.
                # (source row j maps to time t0 + j + s)
                body = tt - s
                if body > 0:
                    dead = t_idx[:body] >= (len_b - s)
                    out_ref[s:, lo:lo + F] = jnp.where(
                        dead, zero, src_b[:body]).astype(out_ref.dtype)

                # Head rows [0, min(s, tt)): history preceding this tile —
                # frame 0 (clamp) on the first tile, previous-tile tail
                # (read from the small aligned halo block) otherwise.
                h = min(s, tt)
                if h > 0:
                    first = jnp.broadcast_to(src_b[0:1], (h, F))
                    if has_halo:
                        prev = halo_ref[halo_rows - s: halo_rows - s + h,
                                        b * F:(b + 1) * F]
                        head = jnp.where(pl.program_id(0) == 0, first, prev)
                    else:
                        head = first
                    dead_h = t_idx[:h] >= len_b
                    out_ref[:h, lo:lo + F] = jnp.where(
                        dead_h, zero, head).astype(out_ref.dtype)

    return kernel


def _pick_time_tile(T, B, F, ns, itemsize, halo_rows):
    if T <= halo_rows:
        return T
    lanes_in = _round_up(B * F, 128)
    lanes_out = _round_up(B * ns * F, 128)
    # Double-buffered input + output blocks plus rough in-kernel intermediates
    # (time iota / masks at lane width F), per time row.
    bytes_per_row = (2 * (lanes_in + lanes_out) * itemsize
                     + 3 * _round_up(F, 128) * 4)
    budget = max(8 << 20, min(_vmem_capacity_bytes() // 4, 32 << 20))
    tt = budget // bytes_per_row
    tt = min(tt, 1024)                      # diminishing returns past ~1K rows
    if T >= 2 * halo_rows:
        # Keep at least 2 grid steps so the "parallel" time axis can shard
        # across both TensorCores on v7x (single-TC chips are unaffected).
        tt = min(tt, _round_up((T + 1) // 2, halo_rows))
    tt = max(halo_rows, (tt // halo_rows) * halo_rows)
    if tt >= T:
        return T
    return int(tt)


def stack_frames(seqs, lens, num_stack=NUM_STACK, time_tile=None):
    """seqs: (T, B, F), lens: (B,) int  ->  (out: (T, B, num_stack*F), lens)."""
    T, B, F = seqs.shape
    ns = int(num_stack)
    itemsize = jnp.dtype(seqs.dtype).itemsize
    sub = 8 * max(1, 4 // itemsize)                 # sublane pack: f32=8, bf16=16
    halo_rows = max(sub, _round_up(max(ns - 1, 1), sub))

    if time_tile is None:
        tt = _pick_time_tile(T, B, F, ns, itemsize, halo_rows)
    else:
        tt = int(time_tile)
    tt = max(1, min(tt, T))
    ntiles = -(-T // tt)
    has_halo = (ntiles > 1) and (ns > 1)
    if has_halo and tt % halo_rows != 0:
        # Required so the aligned halo block ends exactly at the tile start.
        raise ValueError(f"time_tile={tt} must be a multiple of {halo_rows} "
                         f"when the time axis is tiled")

    lens_i32 = jnp.asarray(lens).reshape(B).astype(jnp.int32)
    x2 = seqs.reshape(T, B * F)                     # lane-major, free reshape

    in_specs = [pl.BlockSpec((tt, B * F), lambda t, lens: (t, 0))]
    inputs = [x2]
    if has_halo:
        bpt = tt // halo_rows                       # halo blocks per tile
        in_specs.append(
            pl.BlockSpec((halo_rows, B * F),
                         lambda t, lens: (jnp.maximum(t * bpt - 1, 0), 0)))
        inputs.append(x2)                           # same array, halo view
    out_spec = pl.BlockSpec((tt, B * ns * F), lambda t, lens: (t, 0))

    # VMEM accounting: double-buffered blocks + in-kernel intermediates.
    lanes_in = _round_up(B * F, 128)
    lanes_out = _round_up(B * ns * F, 128)
    block_bytes = 2 * itemsize * tt * (lanes_in + lanes_out)
    if has_halo:
        block_bytes += 2 * itemsize * halo_rows * lanes_in
    scratch_bytes = 6 * tt * _round_up(F, 128) * 4
    vmem_limit = max(32 << 20, block_bytes + scratch_bytes + (4 << 20))
    vmem_limit = min(vmem_limit, max(32 << 20, _vmem_capacity_bytes() - (16 << 20)))

    bytes_accessed = (T * B * F * itemsize                          # input ~1x
                      + (ntiles * halo_rows * B * F * itemsize if has_halo else 0)
                      + B * 4                                       # lens
                      + T * B * ns * F * itemsize)                  # output

    out2 = pl.pallas_call(
        _make_kernel(num_stack=ns, B=B, F=F, tt=tt,
                     halo_rows=halo_rows, has_halo=has_halo),
        out_shape=jax.ShapeDtypeStruct((T, B * ns * F), seqs.dtype),
        grid_spec=pltpu.PrefetchScalarGridSpec(
            num_scalar_prefetch=1,
            grid=(ntiles,),
            in_specs=in_specs,
            out_specs=out_spec,
        ),
        compiler_params=pltpu.CompilerParams(
            dimension_semantics=("parallel",),
            vmem_limit_bytes=int(vmem_limit)),
        cost_estimate=pl.CostEstimate(
            flops=0, transcendentals=0, bytes_accessed=int(bytes_accessed)),
    )(lens_i32, *inputs)

    # TODO(synk): PackedSequence input path (pad_packed/pack_padded) has no Pallas
    # equivalent; only the (seqs, lens) tensor path is implemented.
    return out2.reshape(T, B, ns * F), lens


def stack_frames_ref(seqs, lens, num_stack):
    """Pure-JAX reference mirroring the PyTorch forward."""
    T, B, F = seqs.shape
    first = jnp.broadcast_to(seqs[0:1], (num_stack - 1, B, F))
    padded = jnp.concatenate([first, seqs], axis=0)
    chunks = [padded[i:i + T] for i in range(num_stack)]
    out = jnp.concatenate(chunks, axis=-1)
    mask = (jnp.arange(T)[:, None] >= lens[None, :])[:, :, None]
    return jnp.where(mask, jnp.zeros_like(out), out)


if __name__ == "__main__":
    key = jax.random.PRNGKey(0)
    T, B, F = 64, 4, 128
    seqs = jax.random.normal(key, (T, B, F), dtype=jnp.float32)
    lens = jnp.array([64, 37, 11, 50], dtype=jnp.int32)
    ref = stack_frames_ref(seqs, lens, NUM_STACK)

    # Explicit small tiles (multi-tile + halo path).
    out_tiled, _ = stack_frames(seqs, lens, NUM_STACK, time_tile=16)
    jax.block_until_ready(out_tiled)
    np.testing.assert_allclose(np.asarray(out_tiled), np.asarray(ref), atol=1e-6)

    # Auto-tiled path (VMEM-budget tiles, >= 2 tiles for megacore sharding).
    out_auto, out_lens = stack_frames(seqs, lens, NUM_STACK)
    jax.block_until_ready(out_auto)
    np.testing.assert_allclose(np.asarray(out_auto), np.asarray(ref), atol=1e-6)

    # Ragged T (partial last tile) + short sequences.
    T2 = 40
    seqs2 = jax.random.normal(jax.random.PRNGKey(1), (T2, B, F), jnp.float32)
    lens2 = jnp.array([40, 3, 25, 17], dtype=jnp.int32)
    ref2 = stack_frames_ref(seqs2, lens2, NUM_STACK)
    out2, _ = stack_frames(seqs2, lens2, NUM_STACK, time_tile=16)
    jax.block_until_ready(out2)
    np.testing.assert_allclose(np.asarray(out2), np.asarray(ref2), atol=1e-6)

    assert out_auto.shape == (T, B, NUM_STACK * F)
    print("KERNEL_OK")
</pallas_src>

<mosaic_0001>
module attributes {stable_mosaic.version = 11 : i64} {
  func.func @kernel(%arg0: i32, %arg1: memref<4xi32, #tpu.memory_space<smem>>, %arg2: memref<16x512xf32, #tpu.memory_space<vmem>>, %arg3: memref<8x512xf32, #tpu.memory_space<vmem>>, %arg4: memref<16x2048xf32, #tpu.memory_space<vmem>>) attributes {dimension_semantics = [#tpu.dimension_semantics<parallel>], iteration_bounds = array<i64: 4>, scalar_prefetch = 1 : i64, scratch_operands = 0 : i64, tpu.core_type = #tpu.core_type<tc>, window_params = [{transform_indices = @transform_0, window_bounds = array<i64: 16, 512>}, {transform_indices = @transform_1, window_bounds = array<i64: 8, 512>}, {transform_indices = @transform_2, window_bounds = array<i64: 16, 2048>}]} {
    %c16_i32 = arith.constant 16 : i32
    %0 = arith.muli %arg0, %c16_i32 : i32
    %1 = tpu.iota {dimensions = array<i32: 0>} : vector<16x128xi32>
    %2 = vector.broadcast %0 : i32 to vector<16x128xi32>
    %3 = arith.addi %1, %2 : vector<16x128xi32>
    %c0 = arith.constant 0 : index
    %c0_0 = arith.constant 0 : index
    %4 = vector.load %arg2[%c0, %c0_0] : memref<16x512xf32, #tpu.memory_space<vmem>>, vector<16x128xf32>
    %c0_1 = arith.constant 0 : index
    %5 = memref.load %arg1[%c0_1] : memref<4xi32, #tpu.memory_space<smem>>
    %6 = vector.extract_strided_slice %3 {offsets = [0, 0], sizes = [13, 128], strides = [1, 1]} : vector<16x128xi32> to vector<13x128xi32>
    %c3_i32 = arith.constant 3 : i32
    %7 = arith.subi %5, %c3_i32 : i32
    %8 = vector.broadcast %7 : i32 to vector<13x128xi32>
    %9 = arith.cmpi sge, %6, %8 : vector<13x128xi32>
    %10 = vector.extract_strided_slice %4 {offsets = [0, 0], sizes = [13, 128], strides = [1, 1]} : vector<16x128xf32> to vector<13x128xf32>
    %cst = arith.constant 0.000000e+00 : f32
    %11 = vector.broadcast %cst : f32 to vector<13x128xf32>
    %12 = arith.select %9, %11, %10 : vector<13x128xi1>, vector<13x128xf32>
    %c3 = arith.constant 3 : index
    %c0_2 = arith.constant 0 : index
    %13 = vector.load %arg4[%c3, %c0_2] : memref<16x2048xf32, #tpu.memory_space<vmem>>, vector<13x128xf32>
    tpu.vector_store %arg4[%c3, %c0_2], %12 {strides = array<i32>} : memref<16x2048xf32, #tpu.memory_space<vmem>>, vector<13x128xf32>,
    %14 = vector.extract_strided_slice %4 {offsets = [0, 0], sizes = [1, 128], strides = [1, 1]} : vector<16x128xf32> to vector<1x128xf32>
    %15 = vector.shape_cast %14 : vector<1x128xf32> to vector<1x128xf32>
    %16 = vector.broadcast %15 : vector<1x128xf32> to vector<3x128xf32>
    %c5 = arith.constant 5 : index
    %c0_3 = arith.constant 0 : index
    %17 = vector.load %arg3[%c5, %c0_3] : memref<8x512xf32, #tpu.memory_space<vmem>>, vector<3x128xf32>
    %c0_i32 = arith.constant 0 : i32
    %18 = arith.cmpi eq, %arg0, %c0_i32 : i32
    %19 = arith.select %18, %16, %17 : vector<3x128xf32>
    %20 = vector.extract_strided_slice %3 {offsets = [0, 0], sizes = [3, 128], strides = [1, 1]} : vector<16x128xi32> to vector<3x128xi32>
    %21 = vector.broadcast %5 : i32 to vector<3x128xi32>
    %22 = arith.cmpi sge, %20, %21 : vector<3x128xi32>
    %cst_4 = arith.constant 0.000000e+00 : f32
    %23 = vector.broadcast %cst_4 : f32 to vector<3x128xf32>
    %24 = arith.select %22, %23, %19 : vector<3x128xi1>, vector<3x128xf32>
    %c0_5 = arith.constant 0 : index
    %c0_6 = arith.constant 0 : index
    %25 = vector.load %arg4[%c0_5, %c0_6] : memref<16x2048xf32, #tpu.memory_space<vmem>>, vector<3x128xf32>
    tpu.vector_store %arg4[%c0_5, %c0_6], %24 {strides = array<i32>} : memref<16x2048xf32, #tpu.memory_space<vmem>>, vector<3x128xf32>,
    %26 = vector.extract_strided_slice %3 {offsets = [0, 0], sizes = [14, 128], strides = [1, 1]} : vector<16x128xi32> to vector<14x128xi32>
    %c2_i32 = arith.constant 2 : i32
    %27 = arith.subi %5, %c2_i32 : i32
    %28 = vector.broadcast %27 : i32 to vector<14x128xi32>
    %29 = arith.cmpi sge, %26, %28 : vector<14x128xi32>
    %30 = vector.extract_strided_slice %4 {offsets = [0, 0], sizes = [14, 128], strides = [1, 1]} : vector<16x128xf32> to vector<14x128xf32>
    %cst_7 = arith.constant 0.000000e+00 : f32
    %31 = vector.broadcast %cst_7 : f32 to vector<14x128xf32>
    %32 = arith.select %29, %31, %30 : vector<14x128xi1>, vector<14x128xf32>
    %c2 = arith.constant 2 : index
    %c128 = arith.constant 128 : index
    %33 = vector.load %arg4[%c2, %c128] : memref<16x2048xf32, #tpu.memory_space<vmem>>, vector<14x128xf32>
    tpu.vector_store %arg4[%c2, %c128], %32 {strides = array<i32>} : memref<16x2048xf32, #tpu.memory_space<vmem>>, vector<14x128xf32>,
    %34 = vector.extract_strided_slice %4 {offsets = [0, 0], sizes = [1, 128], strides = [1, 1]} : vector<16x128xf32> to vector<1x128xf32>
    %35 = vector.shape_cast %34 : vector<1x128xf32> to vector<1x128xf32>
    %36 = vector.broadcast %35 : vector<1x128xf32> to vector<2x128xf32>
    %c6 = arith.constant 6 : index
    %c0_8 = arith.constant 0 : index
    %37 = vector.load %arg3[%c6, %c0_8] : memref<8x512xf32, #tpu.memory_space<vmem>>, vector<2x128xf32>
    %c0_i32_9 = arith.constant 0 : i32
    %38 = arith.cmpi eq, %arg0, %c0_i32_9 : i32
    %39 = arith.select %38, %36, %37 : vector<2x128xf32>
    %40 = vector.extract_strided_slice %3 {offsets = [0, 0], sizes = [2, 128], strides = [1, 1]} : vector<16x128xi32> to vector<2x128xi32>
    %41 = vector.broadcast %5 : i32 to vector<2x128xi32>
    %42 = arith.cmpi sge, %40, %41 : vector<2x128xi32>
    %cst_10 = arith.constant 0.000000e+00 : f32
    %43 = vector.broadcast %cst_10 : f32 to vector<2x128xf32>
    %44 = arith.select %42, %43, %39 : vector<2x128xi1>, vector<2x128xf32>
    %c0_11 = arith.constant 0 : index
    %c128_12 = arith.constant 128 : index
    %45 = vector.load %arg4[%c0_11, %c128_12] : memref<16x2048xf32, #tpu.memory_space<vmem>>, vector<2x128xf32>
    tpu.vector_store %arg4[%c0_11, %c128_12], %44 {strides = array<i32>} : memref<16x2048xf32, #tpu.memory_space<vmem>>, vector<2x128xf32>,
    %46 = vector.extract_strided_slice %3 {offsets = [0, 0], sizes = [15, 128], strides = [1, 1]} : vector<16x128xi32> to vector<15x128xi32>
    %c1_i32 = arith.constant 1 : i32
    %47 = arith.subi %5, %c1_i32 : i32
    %48 = vector.broadcast %47 : i32 to vector<15x128xi32>
    %49 = arith.cmpi sge, %46, %48 : vector<15x128xi32>
    %50 = vector.extract_strided_slice %4 {offsets = [0, 0], sizes = [15, 128], strides = [1, 1]} : vector<16x128xf32> to vector<15x128xf32>
    %cst_13 = arith.constant 0.000000e+00 : f32
    %51 = vector.broadcast %cst_13 : f32 to vector<15x128xf32>
    %52 = arith.select %49, %51, %50 : vector<15x128xi1>, vector<15x128xf32>
    %c1 = arith.constant 1 : index
    %c256 = arith.constant 256 : index
    %53 = vector.load %arg4[%c1, %c256] : memref<16x2048xf32, #tpu.memory_space<vmem>>, vector<15x128xf32>
    tpu.vector_store %arg4[%c1, %c256], %52 {strides = array<i32>} : memref<16x2048xf32, #tpu.memory_space<vmem>>, vector<15x128xf32>,
    %54 = vector.extract_strided_slice %4 {offsets = [0, 0], sizes = [1, 128], strides = [1, 1]} : vector<16x128xf32> to vector<1x128xf32>
    %c7 = arith.constant 7 : index
    %c0_14 = arith.constant 0 : index
    %55 = vector.load %arg3[%c7, %c0_14] : memref<8x512xf32, #tpu.memory_space<vmem>>, vector<1x128xf32>
    %c0_i32_15 = arith.constant 0 : i32
    %56 = arith.cmpi eq, %arg0, %c0_i32_15 : i32
    %57 = arith.select %56, %54, %55 : vector<1x128xf32>
    %58 = vector.extract_strided_slice %3 {offsets = [0, 0], sizes = [1, 128], strides = [1, 1]} : vector<16x128xi32> to vector<1x128xi32>
    %59 = vector.broadcast %5 : i32 to vector<1x128xi32>
    %60 = arith.cmpi sge, %58, %59 : vector<1x128xi32>
    %cst_16 = arith.constant 0.000000e+00 : f32
    %61 = vector.broadcast %cst_16 : f32 to vector<1x128xf32>
    %62 = arith.select %60, %61, %57 : vector<1x128xi1>, vector<1x128xf32>
    %c0_17 = arith.constant 0 : index
    %c256_18 = arith.constant 256 : index
    %63 = vector.load %arg4[%c0_17, %c256_18] : memref<16x2048xf32, #tpu.memory_space<vmem>>, vector<1x128xf32>
    tpu.vector_store %arg4[%c0_17, %c256_18], %62 {strides = array<i32>} : memref<16x2048xf32, #tpu.memory_space<vmem>>, vector<1x128xf32>,
    %c0_i32_19 = arith.constant 0 : i32
    %64 = arith.subi %5, %c0_i32_19 : i32
    %65 = vector.broadcast %64 : i32 to vector<16x128xi32>
    %66 = arith.cmpi sge, %3, %65 : vector<16x128xi32>
    %cst_20 = arith.constant 0.000000e+00 : f32
    %67 = vector.broadcast %cst_20 : f32 to vector<16x128xf32>
    %68 = arith.select %66, %67, %4 : vector<16x128xi1>, vector<16x128xf32>
    %c0_21 = arith.constant 0 : index
    %c384 = arith.constant 384 : index
    %69 = vector.load %arg4[%c0_21, %c384] : memref<16x2048xf32, #tpu.memory_space<vmem>>, vector<16x128xf32>
    tpu.vector_store %arg4[%c0_21, %c384], %68 {strides = array<i32>} : memref<16x2048xf32, #tpu.memory_space<vmem>>, vector<16x128xf32>,
    %c0_22 = arith.constant 0 : index
    %c128_23 = arith.constant 128 : index
    %70 = vector.load %arg2[%c0_22, %c128_23] : memref<16x512xf32, #tpu.memory_space<vmem>>, vector<16x128xf32>
    %c1_24 = arith.constant 1 : index
    %71 = memref.load %arg1[%c1_24] : memref<4xi32, #tpu.memory_space<smem>>
    %72 = vector.extract_strided_slice %3 {offsets = [0, 0], sizes = [13, 128], strides = [1, 1]} : vector<16x128xi32> to vector<13x128xi32>
    %c3_i32_25 = arith.constant 3 : i32
    %73 = arith.subi %71, %c3_i32_25 : i32
    %74 = vector.broadcast %73 : i32 to vector<13x128xi32>
    %75 = arith.cmpi sge, %72, %74 : vector<13x128xi32>
    %76 = vector.extract_strided_slice %70 {offsets = [0, 0], sizes = [13, 128], strides = [1, 1]} : vector<16x128xf32> to vector<13x128xf32>
    %cst_26 = arith.constant 0.000000e+00 : f32
    %77 = vector.broadcast %cst_26 : f32 to vector<13x128xf32>
    %78 = arith.select %75, %77, %76 : vector<13x128xi1>, vector<13x128xf32>
    %c3_27 = arith.constant 3 : index
    %c512 = arith.constant 512 : index
    %79 = vector.load %arg4[%c3_27, %c512] : memref<16x2048xf32, #tpu.memory_space<vmem>>, vector<13x128xf32>
    tpu.vector_store %arg4[%c3_27, %c512], %78 {strides = array<i32>} : memref<16x2048xf32, #tpu.memory_space<vmem>>, vector<13x128xf32>,
    %80 = vector.extract_strided_slice %70 {offsets = [0, 0], sizes = [1, 128], strides = [1, 1]} : vector<16x128xf32> to vector<1x128xf32>
    %81 = vector.shape_cast %80 : vector<1x128xf32> to vector<1x128xf32>
    %82 = vector.broadcast %81 : vector<1x128xf32> to vector<3x128xf32>
    %c5_28 = arith.constant 5 : index
    %c128_29 = arith.constant 128 : index
    %83 = vector.load %arg3[%c5_28, %c128_29] : memref<8x512xf32, #tpu.memory_space<vmem>>, vector<3x128xf32>
    %c0_i32_30 = arith.constant 0 : i32
    %84 = arith.cmpi eq, %arg0, %c0_i32_30 : i32
    %85 = arith.select %84, %82, %83 : vector<3x128xf32>
    %86 = vector.extract_strided_slice %3 {offsets = [0, 0], sizes = [3, 128], strides = [1, 1]} : vector<16x128xi32> to vector<3x128xi32>
    %87 = vector.broadcast %71 : i32 to vector<3x128xi32>
    %88 = arith.cmpi sge, %86, %87 : vector<3x128xi32>
    %cst_31 = arith.constant 0.000000e+00 : f32
    %89 = vector.broadcast %cst_31 : f32 to vector<3x128xf32>
    %90 = arith.select %88, %89, %85 : vector<3x128xi1>, vector<3x128xf32>
    %c0_32 = arith.constant 0 : index
    %c512_33 = arith.constant 512 : index
    %91 = vector.load %arg4[%c0_32, %c512_33] : memref<16x2048xf32, #tpu.memory_space<vmem>>, vector<3x128xf32>
    tpu.vector_store %arg4[%c0_32, %c512_33], %90 {strides = array<i32>} : memref<16x2048xf32, #tpu.memory_space<vmem>>, vector<3x128xf32>,
    %92 = vector.extract_strided_slice %3 {offsets = [0, 0], sizes = [14, 128], strides = [1, 1]} : vector<16x128xi32> to vector<14x128xi32>
    %c2_i32_34 = arith.constant 2 : i32
    %93 = arith.subi %71, %c2_i32_34 : i32
    %94 = vector.broadcast %93 : i32 to vector<14x128xi32>
    %95 = arith.cmpi sge, %92, %94 : vector<14x128xi32>
    %96 = vector.extract_strided_slice %70 {offsets = [0, 0], sizes = [14, 128], strides = [1, 1]} : vector<16x128xf32> to vector<14x128xf32>
    %cst_35 = arith.constant 0.000000e+00 : f32
    %97 = vector.broadcast %cst_35 : f32 to vector<14x128xf32>
    %98 = arith.select %95, %97, %96 : vector<14x128xi1>, vector<14x128xf32>
    %c2_36 = arith.constant 2 : index
    %c640 = arith.constant 640 : index
    %99 = vector.load %arg4[%c2_36, %c640] : memref<16x2048xf32, #tpu.memory_space<vmem>>, vector<14x128xf32>
    tpu.vector_store %arg4[%c2_36, %c640], %98 {strides = array<i32>} : memref<16x2048xf32, #tpu.memory_space<vmem>>, vector<14x128xf32>,
    %100 = vector.extract_strided_slice %70 {offsets = [0, 0], sizes = [1, 128], strides = [1, 1]} : vector<16x128xf32> to vector<1x128xf32>
    %101 = vector.shape_cast %100 : vector<1x128xf32> to vector<1x128xf32>
    %102 = vector.broadcast %101 : vector<1x128xf32> to vector<2x128xf32>
    %c6_37 = arith.constant 6 : index
    %c128_38 = arith.constant 128 : index
    %103 = vector.load %arg3[%c6_37, %c128_38] : memref<8x512xf32, #tpu.memory_space<vmem>>, vector<2x128xf32>
    %c0_i32_39 = arith.constant 0 : i32
    %104 = arith.cmpi eq, %arg0, %c0_i32_39 : i32
    %105 = arith.select %104, %102, %103 : vector<2x128xf32>
    %106 = vector.extract_strided_slice %3 {offsets = [0, 0], sizes = [2, 128], strides = [1, 1]} : vector<16x128xi32> to vector<2x128xi32>
    %107 = vector.broadcast %71 : i32 to vector<2x128xi32>
    %108 = arith.cmpi sge, %106, %107 : vector<2x128xi32>
    %cst_40 = arith.constant 0.000000e+00 : f32
    %109 = vector.broadcast %cst_40 : f32 to vector<2x128xf32>
    %110 = arith.select %108, %109, %105 : vector<2x128xi1>, vector<2x128xf32>
    %c0_41 = arith.constant 0 : index
    %c640_42 = arith.constant 640 : index
    %111 = vector.load %arg4[%c0_41, %c640_42] : memref<16x2048xf32, #tpu.memory_space<vmem>>, vector<2x128xf32>
    tpu.vector_store %arg4[%c0_41, %c640_42], %110 {strides = array<i32>} : memref<16x2048xf32, #tpu.memory_space<vmem>>, vector<2x128xf32>,
    %112 = vector.extract_strided_slice %3 {offsets = [0, 0], sizes = [15, 128], strides = [1, 1]} : vector<16x128xi32> to vector<15x128xi32>
    %c1_i32_43 = arith.constant 1 : i32
    %113 = arith.subi %71, %c1_i32_43 : i32
    %114 = vector.broadcast %113 : i32 to vector<15x128xi32>
    %115 = arith.cmpi sge, %112, %114 : vector<15x128xi32>
    %116 = vector.extract_strided_slice %70 {offsets = [0, 0], sizes = [15, 128], strides = [1, 1]} : vector<16x128xf32> to vector<15x128xf32>
    %cst_44 = arith.constant 0.000000e+00 : f32
    %117 = vector.broadcast %cst_44 : f32 to vector<15x128xf32>
    %118 = arith.select %115, %117, %116 : vector<15x128xi1>, vector<15x128xf32>
    %c1_45 = arith.constant 1 : index
    %c768 = arith.constant 768 : index
    %119 = vector.load %arg4[%c1_45, %c768] : memref<16x2048xf32, #tpu.memory_space<vmem>>, vector<15x128xf32>
    tpu.vector_store %arg4[%c1_45, %c768], %118 {strides = array<i32>} : memref<16x2048xf32, #tpu.memory_space<vmem>>, vector<15x128xf32>,
    %120 = vector.extract_strided_slice %70 {offsets = [0, 0], sizes = [1, 128], strides = [1, 1]} : vector<16x128xf32> to vector<1x128xf32>
    %c7_46 = arith.constant 7 : index
    %c128_47 = arith.constant 128 : index
    %121 = vector.load %arg3[%c7_46, %c128_47] : memref<8x512xf32, #tpu.memory_space<vmem>>, vector<1x128xf32>
    %c0_i32_48 = arith.constant 0 : i32
    %122 = arith.cmpi eq, %arg0, %c0_i32_48 : i32
    %123 = arith.select %122, %120, %121 : vector<1x128xf32>
    %124 = vector.extract_strided_slice %3 {offsets = [0, 0], sizes = [1, 128], strides = [1, 1]} : vector<16x128xi32> to vector<1x128xi32>
    %125 = vector.broadcast %71 : i32 to vector<1x128xi32>
    %126 = arith.cmpi sge, %124, %125 : vector<1x128xi32>
    %cst_49 = arith.constant 0.000000e+00 : f32
    %127 = vector.broadcast %cst_49 : f32 to vector<1x128xf32>
    %128 = arith.select %126, %127, %123 : vector<1x128xi1>, vector<1x128xf32>
    %c0_50 = arith.constant 0 : index
    %c768_51 = arith.constant 768 : index
    %129 = vector.load %arg4[%c0_50, %c768_51] : memref<16x2048xf32, #tpu.memory_space<vmem>>, vector<1x128xf32>
    tpu.vector_store %arg4[%c0_50, %c768_51], %128 {strides = array<i32>} : memref<16x2048xf32, #tpu.memory_space<vmem>>, vector<1x128xf32>,
    %c0_i32_52 = arith.constant 0 : i32
    %130 = arith.subi %71, %c0_i32_52 : i32
    %131 = vector.broadcast %130 : i32 to vector<16x128xi32>
    %132 = arith.cmpi sge, %3, %131 : vector<16x128xi32>
    %cst_53 = arith.constant 0.000000e+00 : f32
    %133 = vector.broadcast %cst_53 : f32 to vector<16x128xf32>
    %134 = arith.select %132, %133, %70 : vector<16x128xi1>, vector<16x128xf32>
    %c0_54 = arith.constant 0 : index
    %c896 = arith.constant 896 : index
    %135 = vector.load %arg4[%c0_54, %c896] : memref<16x2048xf32, #tpu.memory_space<vmem>>, vector<16x128xf32>
    tpu.vector_store %arg4[%c0_54, %c896], %134 {strides = array<i32>} : memref<16x2048xf32, #tpu.memory_space<vmem>>, vector<16x128xf32>,
    %c0_55 = arith.constant 0 : index
    %c256_56 = arith.constant 256 : index
    %136 = vector.load %arg2[%c0_55, %c256_56] : memref<16x512xf32, #tpu.memory_space<vmem>>, vector<16x128xf32>
    %c2_57 = arith.constant 2 : index
    %137 = memref.load %arg1[%c2_57] : memref<4xi32, #tpu.memory_space<smem>>
    %138 = vector.extract_strided_slice %3 {offsets = [0, 0], sizes = [13, 128], strides = [1, 1]} : vector<16x128xi32> to vector<13x128xi32>
    %c3_i32_58 = arith.constant 3 : i32
    %139 = arith.subi %137, %c3_i32_58 : i32
    %140 = vector.broadcast %139 : i32 to vector<13x128xi32>
    %141 = arith.cmpi sge, %138, %140 : vector<13x128xi32>
    %142 = vector.extract_strided_slice %136 {offsets = [0, 0], sizes = [13, 128], strides = [1, 1]} : vector<16x128xf32> to vector<13x128xf32>
    %cst_59 = arith.constant 0.000000e+00 : f32
    %143 = vector.broadcast %cst_59 : f32 to vector<13x128xf32>
    %144 = arith.select %141, %143, %142 : vector<13x128xi1>, vector<13x128xf32>
    %c3_60 = arith.constant 3 : index
    %c1024 = arith.constant 1024 : index
    %145 = vector.load %arg4[%c3_60, %c1024] : memref<16x2048xf32, #tpu.memory_space<vmem>>, vector<13x128xf32>
    tpu.vector_store %arg4[%c3_60, %c1024], %144 {strides = array<i32>} : memref<16x2048xf32, #tpu.memory_space<vmem>>, vector<13x128xf32>,
    %146 = vector.extract_strided_slice %136 {offsets = [0, 0], sizes = [1, 128], strides = [1, 1]} : vector<16x128xf32> to vector<1x128xf32>
    %147 = vector.shape_cast %146 : vector<1x128xf32> to vector<1x128xf32>
    %148 = vector.broadcast %147 : vector<1x128xf32> to vector<3x128xf32>
    %c5_61 = arith.constant 5 : index
    %c256_62 = arith.constant 256 : index
    %149 = vector.load %arg3[%c5_61, %c256_62] : memref<8x512xf32, #tpu.memory_space<vmem>>, vector<3x128xf32>
    %c0_i32_63 = arith.constant 0 : i32
    %150 = arith.cmpi eq, %arg0, %c0_i32_63 : i32
    %151 = arith.select %150, %148, %149 : vector<3x128xf32>
    %152 = vector.extract_strided_slice %3 {offsets = [0, 0], sizes = [3, 128], strides = [1, 1]} : vector<16x128xi32> to vector<3x128xi32>
    %153 = vector.broadcast %137 : i32 to vector<3x128xi32>
    %154 = arith.cmpi sge, %152, %153 : vector<3x128xi32>
    %cst_64 = arith.constant 0.000000e+00 : f32
    %155 = vector.broadcast %cst_64 : f32 to vector<3x128xf32>
    %156 = arith.select %154, %155, %151 : vector<3x128xi1>, vector<3x128xf32>
    %c0_65 = arith.constant 0 : index
    %c1024_66 = arith.constant 1024 : index
    %157 = vector.load %arg4[%c0_65, %c1024_66] : memref<16x2048xf32, #tpu.memory_space<vmem>>, vector<3x128xf32>
    tpu.vector_store %arg4[%c0_65, %c1024_66], %156 {strides = array<i32>} : memref<16x2048xf32, #tpu.memory_space<vmem>>, vector<3x128xf32>,
    %158 = vector.extract_strided_slice %3 {offsets = [0, 0], sizes = [14, 128], strides = [1, 1]} : vector<16x128xi32> to vector<14x128xi32>
    %c2_i32_67 = arith.constant 2 : i32
    %159 = arith.subi %137, %c2_i32_67 : i32
    %160 = vector.broadcast %159 : i32 to vector<14x128xi32>
    %161 = arith.cmpi sge, %158, %160 : vector<14x128xi32>
    %162 = vector.extract_strided_slice %136 {offsets = [0, 0], sizes = [14, 128], strides = [1, 1]} : vector<16x128xf32> to vector<14x128xf32>
    %cst_68 = arith.constant 0.000000e+00 : f32
    %163 = vector.broadcast %cst_68 : f32 to vector<14x128xf32>
    %164 = arith.select %161, %163, %162 : vector<14x128xi1>, vector<14x128xf32>
    %c2_69 = arith.constant 2 : index
    %c1152 = arith.constant 1152 : index
    %165 = vector.load %arg4[%c2_69, %c1152] : memref<16x2048xf32, #tpu.memory_space<vmem>>, vector<14x128xf32>
    tpu.vector_store %arg4[%c2_69, %c1152], %164 {strides = array<i32>} : memref<16x2048xf32, #tpu.memory_space<vmem>>, vector<14x128xf32>,
    %166 = vector.extract_strided_slice %136 {offsets = [0, 0], sizes = [1, 128], strides = [1, 1]} : vector<16x128xf32> to vector<1x128xf32>
    %167 = vector.shape_cast %166 : vector<1x128xf32> to vector<1x128xf32>
    %168 = vector.broadcast %167 : vector<1x128xf32> to vector<2x128xf32>
    %c6_70 = arith.constant 6 : index
    %c256_71 = arith.constant 256 : index
    %169 = vector.load %arg3[%c6_70, %c256_71] : memref<8x512xf32, #tpu.memory_space<vmem>>, vector<2x128xf32>
    %c0_i32_72 = arith.constant 0 : i32
    %170 = arith.cmpi eq, %arg0, %c0_i32_72 : i32
    %171 = arith.select %170, %168, %169 : vector<2x128xf32>
    %172 = vector.extract_strided_slice %3 {offsets = [0, 0], sizes = [2, 128], strides = [1, 1]} : vector<16x128xi32> to vector<2x128xi32>
    %173 = vector.broadcast %137 : i32 to vector<2x128xi32>
    %174 = arith.cmpi sge, %172, %173 : vector<2x128xi32>
    %cst_73 = arith.constant 0.000000e+00 : f32
    %175 = vector.broadcast %cst_73 : f32 to vector<2x128xf32>
    %176 = arith.select %174, %175, %171 : vector<2x128xi1>, vector<2x128xf32>
    %c0_74 = arith.constant 0 : index
    %c1152_75 = arith.constant 1152 : index
    %177 = vector.load %arg4[%c0_74, %c1152_75] : memref<16x2048xf32, #tpu.memory_space<vmem>>, vector<2x128xf32>
    tpu.vector_store %arg4[%c0_74, %c1152_75], %176 {strides = array<i32>} : memref<16x2048xf32, #tpu.memory_space<vmem>>, vector<2x128xf32>,
    %178 = vector.extract_strided_slice %3 {offsets = [0, 0], sizes = [15, 128], strides = [1, 1]} : vector<16x128xi32> to vector<15x128xi32>
    %c1_i32_76 = arith.constant 1 : i32
    %179 = arith.subi %137, %c1_i32_76 : i32
    %180 = vector.broadcast %179 : i32 to vector<15x128xi32>
    %181 = arith.cmpi sge, %178, %180 : vector<15x128xi32>
    %182 = vector.extract_strided_slice %136 {offsets = [0, 0], sizes = [15, 128], strides = [1, 1]} : vector<16x128xf32> to vector<15x128xf32>
    %cst_77 = arith.constant 0.000000e+00 : f32
    %183 = vector.broadcast %cst_77 : f32 to vector<15x128xf32>
    %184 = arith.select %181, %183, %182 : vector<15x128xi1>, vector<15x128xf32>
    %c1_78 = arith.constant 1 : index
    %c1280 = arith.constant 1280 : index
    %185 = vector.load %arg4[%c1_78, %c1280] : memref<16x2048xf32, #tpu.memory_space<vmem>>, vector<15x128xf32>
    tpu.vector_store %arg4[%c1_78, %c1280], %184 {strides = array<i32>} : memref<16x2048xf32, #tpu.memory_space<vmem>>, vector<15x128xf32>,
    %186 = vector.extract_strided_slice %136 {offsets = [0, 0], sizes = [1, 128], strides = [1, 1]} : vector<16x128xf32> to vector<1x128xf32>
    %c7_79 = arith.constant 7 : index
    %c256_80 = arith.constant 256 : index
    %187 = vector.load %arg3[%c7_79, %c256_80] : memref<8x512xf32, #tpu.memory_space<vmem>>, vector<1x128xf32>
    %c0_i32_81 = arith.constant 0 : i32
    %188 = arith.cmpi eq, %arg0, %c0_i32_81 : i32
    %189 = arith.select %188, %186, %187 : vector<1x128xf32>
    %190 = vector.extract_strided_slice %3 {offsets = [0, 0], sizes = [1, 128], strides = [1, 1]} : vector<16x128xi32> to vector<1x128xi32>
    %191 = vector.broadcast %137 : i32 to vector<1x128xi32>
    %192 = arith.cmpi sge, %190, %191 : vector<1x128xi32>
    %cst_82 = arith.constant 0.000000e+00 : f32
    %193 = vector.broadcast %cst_82 : f32 to vector<1x128xf32>
    %194 = arith.select %192, %193, %189 : vector<1x128xi1>, vector<1x128xf32>
    %c0_83 = arith.constant 0 : index
    %c1280_84 = arith.constant 1280 : index
    %195 = vector.load %arg4[%c0_83, %c1280_84] : memref<16x2048xf32, #tpu.memory_space<vmem>>, vector<1x128xf32>
    tpu.vector_store %arg4[%c0_83, %c1280_84], %194 {strides = array<i32>} : memref<16x2048xf32, #tpu.memory_space<vmem>>, vector<1x128xf32>,
    %c0_i32_85 = arith.constant 0 : i32
    %196 = arith.subi %137, %c0_i32_85 : i32
    %197 = vector.broadcast %196 : i32 to vector<16x128xi32>
    %198 = arith.cmpi sge, %3, %197 : vector<16x128xi32>
    %cst_86 = arith.constant 0.000000e+00 : f32
    %199 = vector.broadcast %cst_86 : f32 to vector<16x128xf32>
    %200 = arith.select %198, %199, %136 : vector<16x128xi1>, vector<16x128xf32>
    %c0_87 = arith.constant 0 : index
    %c1408 = arith.constant 1408 : index
    %201 = vector.load %arg4[%c0_87, %c1408] : memref<16x2048xf32, #tpu.memory_space<vmem>>, vector<16x128xf32>
    tpu.vector_store %arg4[%c0_87, %c1408], %200 {strides = array<i32>} : memref<16x2048xf32, #tpu.memory_space<vmem>>, vector<16x128xf32>,
    %c0_88 = arith.constant 0 : index
    %c384_89 = arith.constant 384 : index
    %202 = vector.load %arg2[%c0_88, %c384_89] : memref<16x512xf32, #tpu.memory_space<vmem>>, vector<16x128xf32>
    %c3_90 = arith.constant 3 : index
    %203 = memref.load %arg1[%c3_90] : memref<4xi32, #tpu.memory_space<smem>>
    %204 = vector.extract_strided_slice %3 {offsets = [0, 0], sizes = [13, 128], strides = [1, 1]} : vector<16x128xi32> to vector<13x128xi32>
    %c3_i32_91 = arith.constant 3 : i32
    %205 = arith.subi %203, %c3_i32_91 : i32
    %206 = vector.broadcast %205 : i32 to vector<13x128xi32>
    %207 = arith.cmpi sge, %204, %206 : vector<13x128xi32>
    %208 = vector.extract_strided_slice %202 {offsets = [0, 0], sizes = [13, 128], strides = [1, 1]} : vector<16x128xf32> to vector<13x128xf32>
    %cst_92 = arith.constant 0.000000e+00 : f32
    %209 = vector.broadcast %cst_92 : f32 to vector<13x128xf32>
    %210 = arith.select %207, %209, %208 : vector<13x128xi1>, vector<13x128xf32>
    %c3_93 = arith.constant 3 : index
    %c1536 = arith.constant 1536 : index
    %211 = vector.load %arg4[%c3_93, %c1536] : memref<16x2048xf32, #tpu.memory_space<vmem>>, vector<13x128xf32>
    tpu.vector_store %arg4[%c3_93, %c1536], %210 {strides = array<i32>} : memref<16x2048xf32, #tpu.memory_space<vmem>>, vector<13x128xf32>,
    %212 = vector.extract_strided_slice %202 {offsets = [0, 0], sizes = [1, 128], strides = [1, 1]} : vector<16x128xf32> to vector<1x128xf32>
    %213 = vector.shape_cast %212 : vector<1x128xf32> to vector<1x128xf32>
    %214 = vector.broadcast %213 : vector<1x128xf32> to vector<3x128xf32>
    %c5_94 = arith.constant 5 : index
    %c384_95 = arith.constant 384 : index
    %215 = vector.load %arg3[%c5_94, %c384_95] : memref<8x512xf32, #tpu.memory_space<vmem>>, vector<3x128xf32>
    %c0_i32_96 = arith.constant 0 : i32
    %216 = arith.cmpi eq, %arg0, %c0_i32_96 : i32
    %217 = arith.select %216, %214, %215 : vector<3x128xf32>
    %218 = vector.extract_strided_slice %3 {offsets = [0, 0], sizes = [3, 128], strides = [1, 1]} : vector<16x128xi32> to vector<3x128xi32>
    %219 = vector.broadcast %203 : i32 to vector<3x128xi32>
    %220 = arith.cmpi sge, %218, %219 : vector<3x128xi32>
    %cst_97 = arith.constant 0.000000e+00 : f32
    %221 = vector.broadcast %cst_97 : f32 to vector<3x128xf32>
    %222 = arith.select %220, %221, %217 : vector<3x128xi1>, vector<3x128xf32>
    %c0_98 = arith.constant 0 : index
    %c1536_99 = arith.constant 1536 : index
    %223 = vector.load %arg4[%c0_98, %c1536_99] : memref<16x2048xf32, #tpu.memory_space<vmem>>, vector<3x128xf32>
    tpu.vector_store %arg4[%c0_98, %c1536_99], %222 {strides = array<i32>} : memref<16x2048xf32, #tpu.memory_space<vmem>>, vector<3x128xf32>,
    %224 = vector.extract_strided_slice %3 {offsets = [0, 0], sizes = [14, 128], strides = [1, 1]} : vector<16x128xi32> to vector<14x128xi32>
    %c2_i32_100 = arith.constant 2 : i32
    %225 = arith.subi %203, %c2_i32_100 : i32
    %226 = vector.broadcast %225 : i32 to vector<14x128xi32>
    %227 = arith.cmpi sge, %224, %226 : vector<14x128xi32>
    %228 = vector.extract_strided_slice %202 {offsets = [0, 0], sizes = [14, 128], strides = [1, 1]} : vector<16x128xf32> to vector<14x128xf32>
    %cst_101 = arith.constant 0.000000e+00 : f32
    %229 = vector.broadcast %cst_101 : f32 to vector<14x128xf32>
    %230 = arith.select %227, %229, %228 : vector<14x128xi1>, vector<14x128xf32>
    %c2_102 = arith.constant 2 : index
    %c1664 = arith.constant 1664 : index
    %231 = vector.load %arg4[%c2_102, %c1664] : memref<16x2048xf32, #tpu.memory_space<vmem>>, vector<14x128xf32>
    tpu.vector_store %arg4[%c2_102, %c1664], %230 {strides = array<i32>} : memref<16x2048xf32, #tpu.memory_space<vmem>>, vector<14x128xf32>,
    %232 = vector.extract_strided_slice %202 {offsets = [0, 0], sizes = [1, 128], strides = [1, 1]} : vector<16x128xf32> to vector<1x128xf32>
    %233 = vector.shape_cast %232 : vector<1x128xf32> to vector<1x128xf32>
    %234 = vector.broadcast %233 : vector<1x128xf32> to vector<2x128xf32>
    %c6_103 = arith.constant 6 : index
    %c384_104 = arith.constant 384 : index
    %235 = vector.load %arg3[%c6_103, %c384_104] : memref<8x512xf32, #tpu.memory_space<vmem>>, vector<2x128xf32>
    %c0_i32_105 = arith.constant 0 : i32
    %236 = arith.cmpi eq, %arg0, %c0_i32_105 : i32
    %237 = arith.select %236, %234, %235 : vector<2x128xf32>
    %238 = vector.extract_strided_slice %3 {offsets = [0, 0], sizes = [2, 128], strides = [1, 1]} : vector<16x128xi32> to vector<2x128xi32>
    %239 = vector.broadcast %203 : i32 to vector<2x128xi32>
    %240 = arith.cmpi sge, %238, %239 : vector<2x128xi32>
    %cst_106 = arith.constant 0.000000e+00 : f32
    %241 = vector.broadcast %cst_106 : f32 to vector<2x128xf32>
    %242 = arith.select %240, %241, %237 : vector<2x128xi1>, vector<2x128xf32>
    %c0_107 = arith.constant 0 : index
    %c1664_108 = arith.constant 1664 : index
    %243 = vector.load %arg4[%c0_107, %c1664_108] : memref<16x2048xf32, #tpu.memory_space<vmem>>, vector<2x128xf32>
    tpu.vector_store %arg4[%c0_107, %c1664_108], %242 {strides = array<i32>} : memref<16x2048xf32, #tpu.memory_space<vmem>>, vector<2x128xf32>,
    %244 = vector.extract_strided_slice %3 {offsets = [0, 0], sizes = [15, 128], strides = [1, 1]} : vector<16x128xi32> to vector<15x128xi32>
    %c1_i32_109 = arith.constant 1 : i32
    %245 = arith.subi %203, %c1_i32_109 : i32
    %246 = vector.broadcast %245 : i32 to vector<15x128xi32>
    %247 = arith.cmpi sge, %244, %246 : vector<15x128xi32>
    %248 = vector.extract_strided_slice %202 {offsets = [0, 0], sizes = [15, 128], strides = [1, 1]} : vector<16x128xf32> to vector<15x128xf32>
    %cst_110 = arith.constant 0.000000e+00 : f32
    %249 = vector.broadcast %cst_110 : f32 to vector<15x128xf32>
    %250 = arith.select %247, %249, %248 : vector<15x128xi1>, vector<15x128xf32>
    %c1_111 = arith.constant 1 : index
    %c1792 = arith.constant 1792 : index
    %251 = vector.load %arg4[%c1_111, %c1792] : memref<16x2048xf32, #tpu.memory_space<vmem>>, vector<15x128xf32>
    tpu.vector_store %arg4[%c1_111, %c1792], %250 {strides = array<i32>} : memref<16x2048xf32, #tpu.memory_space<vmem>>, vector<15x128xf32>,
    %252 = vector.extract_strided_slice %202 {offsets = [0, 0], sizes = [1, 128], strides = [1, 1]} : vector<16x128xf32> to vector<1x128xf32>
    %c7_112 = arith.constant 7 : index
    %c384_113 = arith.constant 384 : index
    %253 = vector.load %arg3[%c7_112, %c384_113] : memref<8x512xf32, #tpu.memory_space<vmem>>, vector<1x128xf32>
    %c0_i32_114 = arith.constant 0 : i32
    %254 = arith.cmpi eq, %arg0, %c0_i32_114 : i32
    %255 = arith.select %254, %252, %253 : vector<1x128xf32>
    %256 = vector.extract_strided_slice %3 {offsets = [0, 0], sizes = [1, 128], strides = [1, 1]} : vector<16x128xi32> to vector<1x128xi32>
    %257 = vector.broadcast %203 : i32 to vector<1x128xi32>
    %258 = arith.cmpi sge, %256, %257 : vector<1x128xi32>
    %cst_115 = arith.constant 0.000000e+00 : f32
    %259 = vector.broadcast %cst_115 : f32 to vector<1x128xf32>
    %260 = arith.select %258, %259, %255 : vector<1x128xi1>, vector<1x128xf32>
    %c0_116 = arith.constant 0 : index
    %c1792_117 = arith.constant 1792 : index
    %261 = vector.load %arg4[%c0_116, %c1792_117] : memref<16x2048xf32, #tpu.memory_space<vmem>>, vector<1x128xf32>
    tpu.vector_store %arg4[%c0_116, %c1792_117], %260 {strides = array<i32>} : memref<16x2048xf32, #tpu.memory_space<vmem>>, vector<1x128xf32>,
    %c0_i32_118 = arith.constant 0 : i32
    %262 = arith.subi %203, %c0_i32_118 : i32
    %263 = vector.broadcast %262 : i32 to vector<16x128xi32>
    %264 = arith.cmpi sge, %3, %263 : vector<16x128xi32>
    %cst_119 = arith.constant 0.000000e+00 : f32
    %265 = vector.broadcast %cst_119 : f32 to vector<16x128xf32>
    %266 = arith.select %264, %265, %202 : vector<16x128xi1>, vector<16x128xf32>
    %c0_120 = arith.constant 0 : index
    %c1920 = arith.constant 1920 : index
    %267 = vector.load %arg4[%c0_120, %c1920] : memref<16x2048xf32, #tpu.memory_space<vmem>>, vector<16x128xf32>
    tpu.vector_store %arg4[%c0_120, %c1920], %266 {strides = array<i32>} : memref<16x2048xf32, #tpu.memory_space<vmem>>, vector<16x128xf32>,
    return
  }
  func.func @transform_0(%arg0: i32, %arg1: memref<4xi32, #tpu.memory_space<smem>>) -> (i32, i32) {
    %c0_i32 = arith.constant 0 : i32
    %c0_i32_0 = arith.constant 0 : i32
    return %arg0, %c0_i32 : i32, i32
  }
  func.func @transform_1(%arg0: i32, %arg1: memref<4xi32, #tpu.memory_space<smem>>) -> (i32, i32) {
    %c2_i32 = arith.constant 2 : i32
    %0 = arith.muli %arg0, %c2_i32 : i32
    %c1_i32 = arith.constant 1 : i32
    %1 = arith.subi %0, %c1_i32 : i32
    %c0_i32 = arith.constant 0 : i32
    %2 = arith.maxsi %1, %c0_i32 : i32
    %c0_i32_0 = arith.constant 0 : i32
    %c0_i32_1 = arith.constant 0 : i32
    return %2, %c0_i32_0 : i32, i32
  }
  func.func @transform_2(%arg0: i32, %arg1: memref<4xi32, #tpu.memory_space<smem>>) -> (i32, i32) {
    %c0_i32 = arith.constant 0 : i32
    %c0_i32_0 = arith.constant 0 : i32
    return %arg0, %c0_i32 : i32, i32
  }
}

</mosaic_0001>

<llo_original>
// kernel: tpu_custom_call.1
$region0: #{tpu_custom_call.1}
  #allocation0 [shape = 'u32[]', space=smem, size = 0x4, offset = 0x4, fixed_abs, tag = 'smem constant byte address 0x4 - core index']
  #allocation1 [shape = 'u32[72,128]{1,0:T(1,128)}', space=vmem, size = 0x9000, scoped, tag = 'internal scratch']
  #allocation2 [shape = 's32[1]{0}', space=sflag, size = 0x4, scoped, tag = 'scoped memory for tpu_custom_call.1']
  #allocation3 [shape = 'u8[512]{0}', space=smem, size = 0x200, scoped, tag = 'prefetched SMEM operand 0']
  %s0 = inlined_call_operand.hbm [shape: s32[4], index: 0, kind: input, shape index: {}]
  %s1 = inlined_call_operand.hbm [shape: f32[64,512], index: 1, kind: input, shape index: {}]
  %s2 = inlined_call_operand.hbm [shape: f32[64,512], index: 2, kind: input, shape index: {}]
  %s3 = inlined_call_operand.hbm [shape: f32[64,2048], index: 3, kind: output, shape index: {}]
  %s4 = sld [smem:[#allocation0]]
  $region49: #{tpu_custom_call.1} parent=0
    _
  %s6 = ssub.s32 1, %s4
  %s7 = scalar_select 0, %s6, %s4
  %s9 = sshll.u32 %s0, 4
  %s10 = int_to_ptr.hbm [resolvable:$true] %s9
  %12 = dma.hbm_to_smem %s10, 16, [#allocation3], [#allocation2]
  %14 = dma.done [#allocation2], 16
  %15 = sfence
  $region1: #{tpu_custom_call.1} parent=0
    #allocation4 [shape = 'u8[65536]{0}', space=vmem, size = 0x10000, scoped, tag = 'input window, operand 1']
    #allocation5 [shape = 's32[2]{0}', space=sflag, size = 0x8, scoped, tag = 'scoped memory for tpu_custom_call.1']
    #allocation6 [shape = 's32[2]{0}', space=sflag, size = 0x8, scoped, tag = 'scoped memory for tpu_custom_call.1']
    #allocation7 [shape = 'u8[32768]{0}', space=vmem, size = 0x8000, scoped, tag = 'input window, operand 2']
    #allocation8 [shape = 's32[2]{0}', space=sflag, size = 0x8, scoped, tag = 'scoped memory for tpu_custom_call.1']
    #allocation9 [shape = 'u8[262144]{0}', space=vmem, size = 0x40000, scoped, tag = 'output window, operand 0']
    %16 = vsyncpa [#allocation5], 0
    %s17 = scalar_lea.sflag [#allocation5], 1
    %18 = vsyncpa %s17, 0
    %19 = vsyncpa [#allocation8], 0
    %s20 = scalar_lea.sflag [#allocation8], 1
    %21 = vsyncpa %s20, 0
    %22 = vsyncpa [#allocation6], 0
    %s23 = scalar_lea.sflag [#allocation6], 1
    %24 = vsyncpa %s23, 0
    loop: start=0, step=1, limit=6
    $region2: #{tpu_custom_call.1} parent=1 // loop_pre_header
      _
    $region3: #{tpu_custom_call.1} parent=1 // loop_header
      %s26 = sphi 0, %s30
      %p27 = scmp.ge.s32.totalorder %s26, 6
      %s36 = sphi 0, %s38
      %s39 = sphi 0, %s36
      %s40 = sphi 0, %s39
      %s56 = sphi 0, %s40
      %s70 = sphi 0, %s72
      %s73 = sphi 0, %s70
      %s74 = sphi 0, %s73
      %s90 = sphi 0, %s74
      %s96 = sphi 0, %s98
      %s99 = sphi 0, %s96
      %s100 = sphi 0, %s99
      %s116 = sphi 0, %s100
    $region4: #{tpu_custom_call.1} parent=1 // loop_header_branch
      %29 = sbr.rel (%p27) target = $region8
    $region5: #{tpu_custom_call.1} parent=1 // loop_body
      %s31 = ssub.s32 %s26, 1
      %s32 = ssub.s32 %s26, 2
      %s33 = sadd.s32 %s26, 1
      %s34 = ssub.s32 %s26, %s33
      %p35 = scmp.eq.s32.totalorder %s34, 0
      %s37 = sadd.s32 %s36, 1
      %s38 = scalar_select %p35, %s36, %s37
      %p41 = pneg %p35
      %p42 = scmp.eq.s32.totalorder %s26, 3
      %p43 = por %p41, %p42
      %p44 = scmp.ne.s32.totalorder %s36, %s39
      %p45 = scmp.eq.s32.totalorder %s26, 0
      %p46 = por %p44, %p45
      %p47 = scmp.ne.s32.totalorder %s36, %s39
      %p48 = scmp.eq.s32.totalorder %s31, 3
      %p49 = por %p47, %p48
      %p50 = scmp.ne.s32.totalorder %s39, %s40
      %p51 = scmp.eq.s32.totalorder %s31, 0
      %p52 = por %p50, %p51
      %p53 = scmp.ne.s32.totalorder %s39, %s40
      %p54 = scmp.eq.s32.totalorder %s32, 3
      %p55 = por %p53, %p54
      %p57 = scmp.ne.s32.totalorder %s40, %s56
      %p58 = scmp.eq.s32.totalorder %s32, 0
      %p59 = por %p57, %p58
      %s60 = smul.u32 %s26, 2
      %s61 = ssub.s32 %s60, 1
      %p62 = scmp.gt.s32.totalorder %s61, 0
      %s63 = scalar_select %p62, %s61, 0
      %s64 = smul.u32 %s33, 2
      %s65 = ssub.s32 %s64, 1
      %p66 = scmp.gt.s32.totalorder %s65, 0
      %s67 = scalar_select %p66, %s65, 0
      %s68 = ssub.s32 %s63, %s67
      %p69 = scmp.eq.s32.totalorder %s68, 0
      %s71 = sadd.s32 %s70, 1
      %s72 = scalar_select %p69, %s70, %s71
      %p75 = pneg %p69
      %p76 = scmp.eq.s32.totalorder %s26, 3
      %p77 = por %p75, %p76
      %p78 = scmp.ne.s32.totalorder %s70, %s73
      %p79 = scmp.eq.s32.totalorder %s26, 0
      %p80 = por %p78, %p79
      %p81 = scmp.ne.s32.totalorder %s70, %s73
      %p82 = scmp.eq.s32.totalorder %s31, 3
      %p83 = por %p81, %p82
      %p84 = scmp.ne.s32.totalorder %s73, %s74
      %p85 = scmp.eq.s32.totalorder %s31, 0
      %p86 = por %p84, %p85
      %p87 = scmp.ne.s32.totalorder %s73, %s74
      %p88 = scmp.eq.s32.totalorder %s32, 3
      %p89 = por %p87, %p88
      %p91 = scmp.ne.s32.totalorder %s74, %s90
      %p92 = scmp.eq.s32.totalorder %s32, 0
      %p93 = por %p91, %p92
      %s94 = ssub.s32 %s26, %s33
      %p95 = scmp.eq.s32.totalorder %s94, 0
      %s97 = sadd.s32 %s96, 1
      %s98 = scalar_select %p95, %s96, %s97
      %p101 = pneg %p95
      %p102 = scmp.eq.s32.totalorder %s26, 3
      %p103 = por %p101, %p102
      %p104 = scmp.ne.s32.totalorder %s96, %s99
      %p105 = scmp.eq.s32.totalorder %s26, 0
      %p106 = por %p104, %p105
      %p107 = scmp.ne.s32.totalorder %s96, %s99
      %p108 = scmp.eq.s32.totalorder %s31, 3
      %p109 = por %p107, %p108
      %p110 = scmp.ne.s32.totalorder %s99, %s100
      %p111 = scmp.eq.s32.totalorder %s31, 0
      %p112 = por %p110, %p111
      %p113 = scmp.ne.s32.totalorder %s99, %s100
      %p114 = scmp.eq.s32.totalorder %s32, 3
      %p115 = por %p113, %p114
      %p117 = scmp.ne.s32.totalorder %s100, %s116
      %p118 = scmp.eq.s32.totalorder %s32, 0
      %p119 = por %p117, %p118
      %p120 = scmp.le.s32.totalorder 1, %s26
      %p121 = scmp.lt.s32.totalorder %s26, 5
      %p122 = pnand %p120, %p121
      %p123 = pneg %p122
      // Predicated region
      $region9: #{tpu_custom_call.1} parent=5 // pred_check
        _
      $region10: #{tpu_custom_call.1} parent=5 // pred_check_branch
        %125 = sbr.rel (%p122) target = $region12
      $region11: #{tpu_custom_call.1} parent=5 // pred_region
        %s126 = ssub.s32 %s26, 1
      $region12: #{tpu_custom_call.1} parent=5 // pred_fallthru
        _
      %p127 = scmp.lt.s32.totalorder %s26, 4
      // Predicated region
      $region13: #{tpu_custom_call.1} parent=5 // pred_check
        %p128 = pneg %p127
      $region14: #{tpu_custom_call.1} parent=5 // pred_check_branch
        %130 = sbr.rel (%p128) target = $region16
      $region15: #{tpu_custom_call.1} parent=5 // pred_region
        // Predicated region
        $region17: #{tpu_custom_call.1} parent=15 // pred_check
          %p131 = pneg %p46
        $region18: #{tpu_custom_call.1} parent=15 // pred_check_branch
          %133 = sbr.rel (%p131) target = $region20
        $region19: #{tpu_custom_call.1} parent=15 // pred_region
          %s134 = sand.u32 %s36, 1
          %s135 = scalar_lea.sflag [#allocation5], %s134
          %s136 = sand.u32 %s36, 1
          %s137 = smul.addr %s136, 64
          %s138 = scalar_lea.vmem [#allocation4], %s137
          %s139 = smul.u32 2, %s26
          %141 = vsyncadd %s135, 0
          %s142 = smul.addr %s139, 4
          %s143 = smul.addr %s142, 8
          %s144 = scalar_lea.hbm %s1, %s143
          %s145 = sshll.u32 %s144, 4
          %s146 = int_to_ptr.hbm [resolvable:$true] %s145
          %s147 = sshll.u32 %s138, 4
          %s148 = int_to_ptr.vmem [resolvable:$true] %s147
          %153 = dma.hbm_to_vmem [thread:$0]  %s146, 1024, %s148, %s135, 512, 512, 32
        $region20: #{tpu_custom_call.1} parent=15 // pred_fallthru
          _
        // Predicated region
        $region21: #{tpu_custom_call.1} parent=15 // pred_check
          %p154 = pneg %p80
        $region22: #{tpu_custom_call.1} parent=15 // pred_check_branch
          %156 = sbr.rel (%p154) target = $region24
        $region23: #{tpu_custom_call.1} parent=15 // pred_region
          %s157 = sand.u32 %s70, 1
          %s158 = scalar_lea.sflag [#allocation8], %s157
          %s159 = sand.u32 %s70, 1
          %s160 = smul.addr %s159, 32
          %s161 = scalar_lea.vmem [#allocation7], %s160
          %s162 = smul.u32 %s26, 2
          %s163 = ssub.s32 %s162, 1
          %p164 = scmp.gt.s32.totalorder %s163, 0
          %s165 = scalar_select %p164, %s163, 0
          %167 = vsyncadd %s158, 0
          %s168 = smul.addr %s165, 4
          %s169 = smul.addr %s168, 8
          %s170 = scalar_lea.hbm %s2, %s169
          %s172 = sshll.u32 %s170, 4
          %s173 = int_to_ptr.hbm [resolvable:$true] %s172
          %s174 = sshll.u32 %s161, 4
          %s175 = int_to_ptr.vmem [resolvable:$true] %s174
          %177 = dma.hbm_to_vmem [thread:$0]  %s173, 512, %s175, %s158
        $region24: #{tpu_custom_call.1} parent=15 // pred_fallthru
          _
      $region16: #{tpu_custom_call.1} parent=5 // pred_fallthru
        _
      %p178 = scmp.le.s32.totalorder 1, %s26
      %p179 = scmp.lt.s32.totalorder %s26, 5
      %p180 = pnand %p178, %p179
      %p181 = pneg %p180
      // Predicated region
      $region25: #{tpu_custom_call.1} parent=5 // pred_check
        _
      $region26: #{tpu_custom_call.1} parent=5 // pred_check_branch
        %183 = sbr.rel (%p180) target = $region28
      $region27: #{tpu_custom_call.1} parent=5 // pred_region
        %s184 = ssub.s32 %s26, 1
        %s185 = sand.u32 %s39, 1
        %s186 = scalar_lea.sflag [#allocation5], %s185
        %s187 = sand.u32 %s39, 1
        %s188 = smul.addr %s187, 64
        %s189 = scalar_lea.vmem [#allocation4], %s188
        // Predicated region
        $region29: #{tpu_custom_call.1} parent=27 // pred_check
          %p190 = pneg %p52
        $region30: #{tpu_custom_call.1} parent=27 // pred_check_branch
          %192 = sbr.rel (%p190) target = $region32
        $region31: #{tpu_custom_call.1} parent=27 // pred_region
          %194 = dma.done %s186, 1024
        $region32: #{tpu_custom_call.1} parent=27 // pred_fallthru
          _
        %s195 = sand.u32 %s73, 1
        %s196 = scalar_lea.sflag [#allocation8], %s195
        %s197 = sand.u32 %s73, 1
        %s198 = smul.addr %s197, 32
        %s199 = scalar_lea.vmem [#allocation7], %s198
        // Predicated region
        $region33: #{tpu_custom_call.1} parent=27 // pred_check
          %p200 = pneg %p86
        $region34: #{tpu_custom_call.1} parent=27 // pred_check_branch
          %202 = sbr.rel (%p200) target = $region36
        $region35: #{tpu_custom_call.1} parent=27 // pred_region
          %204 = dma.done %s196, 512
        $region36: #{tpu_custom_call.1} parent=27 // pred_fallthru
          _
        %s205 = sand.u32 %s39, 1
        %s206 = scalar_lea.sflag [#allocation5], %s205
        %s207 = sand.u32 %s39, 1
        %s208 = smul.addr %s207, 64
        %s209 = scalar_lea.vmem [#allocation4], %s208
        %p210 = pneg %p52
        %p211 = pneg %p49
        %s212 = sand.u32 %s73, 1
        %s213 = scalar_lea.sflag [#allocation8], %s212
        %s214 = sand.u32 %s73, 1
        %s215 = smul.addr %s214, 32
        %s216 = scalar_lea.vmem [#allocation7], %s215
        %p217 = pneg %p86
        %p218 = pneg %p83
        %p219 = pneg %p112
        %p220 = pneg %p109
        %s221 = sand.u32 %s99, 1
        %s222 = scalar_lea.sflag [#allocation6], %s221
        %s223 = sand.u32 %s99, 1
        %s224 = smul.addr %s223, 256
        %s225 = scalar_lea.vmem [#allocation9], %s224
        %s226 = smul.u32 2, %s31
        %s227 = smul.u32 %s31, 2
        %s228 = ssub.s32 %s227, 1
        %p229 = scmp.gt.s32.totalorder %s228, 0
        %s230 = scalar_select %p229, %s228, 0
        %s231 = smul.u32 2, %s31
        %s232 = smul.u32 %s31, 16
        %v233 = vlaneseq
        %v234 = vshrl.u32 %v233, 7
        %v235 = vadd.s32 %v234, 8
        %v236 = vstv %s232
        %v237 = vadd.s32 %v234, %v236
        %v238 = vadd.s32 %v235, %v236
        %v239 = vld [vmem:[%s189] sm:$0xff]
        %v240 = vld [vmem:[%s189 + $0x20] sm:$0xff]
        %s241 = sld [smem:[#allocation3]]
        %s242 = ssub.s32 %s241, 3
        %v243 = vstv %s242
        %vm244 = vcmp.ge.s32.totalorder %v237, %v243
        %vm245 = vcmp.ge.s32.totalorder %v238, %v243
        %v246 = vsel %vm244, 0.0, %v239
        %v247 = vsel %vm245, 0.0, %v240
        %vm250 = vcmask 1042432
        %v251 = vrot.slane %v246, 5
        %v252 = vrot.slane %v247, 5
        %v253 = vsel %vm250, %v251, %v252
        %256 = vst [vmem:[%s225] sm:$0xf8] %v251
        %257 = vst [vmem:[%s225 + $0x80] sm:$0xff] %v253
        %v258 = vperm.slane %v239, 0
        %v259 = vld [vmem:[%s199] sm:$0xe0]
        %p260 = scmp.eq.s32.totalorder %s31, 0
        %s261 = scalar_select %p260, 1, 0
        %v262 = vstv %s261
        %vm263 = vcmp.eq.s32.totalorder %v262, 1
        %v264 = vsel %vm263, %v258, %v259
        %v265 = vstv %s241
        %vm266 = vcmp.ge.s32.totalorder %v237, %v265
        %v268 = vrot.slane %v264, 5
        %v270 = vsel %vm266, 0.0, %v268
        %271 = vst [vmem:[%s225] sm:$0x7] %v270
        %s272 = ssub.s32 %s241, 2
        %v273 = vstv %s272
        %vm274 = vcmp.ge.s32.totalorder %v237, %v273
        %vm275 = vcmp.ge.s32.totalorder %v238, %v273
        %v276 = vsel %vm274, 0.0, %v239
        %v277 = vsel %vm275, 0.0, %v240
        %vm280 = vcmask 1041408
        %v281 = vrot.slane %v276, 6
        %v282 = vrot.slane %v277, 6
        %v283 = vsel %vm280, %v281, %v282
        %286 = vst [vmem:[%s225 + $0x8] sm:$0xfc] %v281
        %287 = vst [vmem:[%s225 + $0x88] sm:$0xff] %v283
        %v288 = vld [vmem:[%s199] sm:$0xc0]
        %v289 = vsel %vm263, %v258, %v288
        %v291 = vrot.slane %v289, 6
        %v293 = vsel %vm266, 0.0, %v291
        %294 = vst [vmem:[%s225 + $0x8] sm:$0x3] %v293
        %s295 = ssub.s32 %s241, 1
        %v296 = vstv %s295
        %vm297 = vcmp.ge.s32.totalorder %v237, %v296
        %vm298 = vcmp.ge.s32.totalorder %v238, %v296
        %v299 = vsel %vm297, 0.0, %v239
        %v300 = vsel %vm298, 0.0, %v240
        %vm303 = vcmask 1040384
        %v304 = vrot.slane %v299, 7
        %v305 = vrot.slane %v300, 7
        %v306 = vsel %vm303, %v304, %v305
        %309 = vst [vmem:[%s225 + $0x10] sm:$0xfe] %v304
        %310 = vst [vmem:[%s225 + $0x90] sm:$0xff] %v306
        %v311 = vld [vmem:[%s199 + $0x7] ss:$0 sm:$0xff]
        %v312 = vsel %vm263, %v239, %v311
        %v313 = vsel %vm266, 0.0, %v312
        %314 = vst [vmem:[%s225 + $0x10] sm:$0x1] %v313
        %vm315 = vcmp.ge.s32.totalorder %v238, %v265
        %v316 = vsel %vm266, 0.0, %v239
        %v317 = vsel %vm315, 0.0, %v240
        %318 = vst [vmem:[%s225 + $0x18] sm:$0xff] %v316
        %319 = vst [vmem:[%s225 + $0x98] sm:$0xff] %v317
        %v320 = vld [vmem:[%s189 + $0x8] sm:$0xff]
        %v321 = vld [vmem:[%s189 + $0x28] sm:$0xff]
        %s322 = sld [smem:[#allocation3 + $0x1]]
        %s323 = ssub.s32 %s322, 3
        %v324 = vstv %s323
        %vm325 = vcmp.ge.s32.totalorder %v237, %v324
        %vm326 = vcmp.ge.s32.totalorder %v238, %v324
        %v327 = vsel %vm325, 0.0, %v320
        %v328 = vsel %vm326, 0.0, %v321
        %v331 = vrot.slane %v327, 5
        %v332 = vrot.slane %v328, 5
        %v333 = vsel %vm250, %v331, %v332
        %336 = vst [vmem:[%s225 + $0x20] sm:$0xf8] %v331
        %337 = vst [vmem:[%s225 + $0xa0] sm:$0xff] %v333
        %v338 = vperm.slane %v320, 0
        %v339 = vld [vmem:[%s199 + $0x8] sm:$0xe0]
        %v340 = vsel %vm263, %v338, %v339
        %v341 = vstv %s322
        %vm342 = vcmp.ge.s32.totalorder %v237, %v341
        %v344 = vrot.slane %v340, 5
        %v346 = vsel %vm342, 0.0, %v344
        %347 = vst [vmem:[%s225 + $0x20] sm:$0x7] %v346
        %s348 = ssub.s32 %s322, 2
        %v349 = vstv %s348
        %vm350 = vcmp.ge.s32.totalorder %v237, %v349
        %vm351 = vcmp.ge.s32.totalorder %v238, %v349
        %v352 = vsel %vm350, 0.0, %v320
        %v353 = vsel %vm351, 0.0, %v321
        %v356 = vrot.slane %v352, 6
        %v357 = vrot.slane %v353, 6
        %v358 = vsel %vm280, %v356, %v357
        %361 = vst [vmem:[%s225 + $0x28] sm:$0xfc] %v356
        %362 = vst [vmem:[%s225 + $0xa8] sm:$0xff] %v358
        %v363 = vld [vmem:[%s199 + $0x8] sm:$0xc0]
        %v364 = vsel %vm263, %v338, %v363
        %v366 = vrot.slane %v364, 6
        %v368 = vsel %vm342, 0.0, %v366
        %369 = vst [vmem:[%s225 + $0x28] sm:$0x3] %v368
        %s370 = ssub.s32 %s322, 1
        %v371 = vstv %s370
        %vm372 = vcmp.ge.s32.totalorder %v237, %v371
        %vm373 = vcmp.ge.s32.totalorder %v238, %v371
        %v374 = vsel %vm372, 0.0, %v320
        %v375 = vsel %vm373, 0.0, %v321
        %v378 = vrot.slane %v374, 7
        %v379 = vrot.slane %v375, 7
        %v380 = vsel %vm303, %v378, %v379
        %383 = vst [vmem:[%s225 + $0x30] sm:$0xfe] %v378
        %384 = vst [vmem:[%s225 + $0xb0] sm:$0xff] %v380
        %v385 = vld [vmem:[%s199 + $0xf] ss:$0 sm:$0xff]
        %v386 = vsel %vm263, %v320, %v385
        %v387 = vsel %vm342, 0.0, %v386
        %388 = vst [vmem:[%s225 + $0x30] sm:$0x1] %v387
        %vm389 = vcmp.ge.s32.totalorder %v238, %v341
        %v390 = vsel %vm342, 0.0, %v320
        %v391 = vsel %vm389, 0.0, %v321
        %392 = vst [vmem:[%s225 + $0x38] sm:$0xff] %v390
        %393 = vst [vmem:[%s225 + $0xb8] sm:$0xff] %v391
        %v394 = vld [vmem:[%s189 + $0x10] sm:$0xff]
        %v395 = vld [vmem:[%s189 + $0x30] sm:$0xff]
        %s396 = sld [smem:[#allocation3 + $0x2]]
        %s397 = ssub.s32 %s396, 3
        %v398 = vstv %s397
        %vm399 = vcmp.ge.s32.totalorder %v237, %v398
        %vm400 = vcmp.ge.s32.totalorder %v238, %v398
        %v401 = vsel %vm399, 0.0, %v394
        %v402 = vsel %vm400, 0.0, %v395
        %v405 = vrot.slane %v401, 5
        %v406 = vrot.slane %v402, 5
        %v407 = vsel %vm250, %v405, %v406
        %410 = vst [vmem:[%s225 + $0x40] sm:$0xf8] %v405
        %411 = vst [vmem:[%s225 + $0xc0] sm:$0xff] %v407
        %v412 = vperm.slane %v394, 0
        %v413 = vld [vmem:[%s199 + $0x10] sm:$0xe0]
        %v414 = vsel %vm263, %v412, %v413
        %v415 = vstv %s396
        %vm416 = vcmp.ge.s32.totalorder %v237, %v415
        %v418 = vrot.slane %v414, 5
        %v420 = vsel %vm416, 0.0, %v418
        %421 = vst [vmem:[%s225 + $0x40] sm:$0x7] %v420
        %s422 = ssub.s32 %s396, 2
        %v423 = vstv %s422
        %vm424 = vcmp.ge.s32.totalorder %v237, %v423
        %vm425 = vcmp.ge.s32.totalorder %v238, %v423
        %v426 = vsel %vm424, 0.0, %v394
        %v427 = vsel %vm425, 0.0, %v395
        %v430 = vrot.slane %v426, 6
        %v431 = vrot.slane %v427, 6
        %v432 = vsel %vm280, %v430, %v431
        %435 = vst [vmem:[%s225 + $0x48] sm:$0xfc] %v430
        %436 = vst [vmem:[%s225 + $0xc8] sm:$0xff] %v432
        %v437 = vld [vmem:[%s199 + $0x10] sm:$0xc0]
        %v438 = vsel %vm263, %v412, %v437
        %v440 = vrot.slane %v438, 6
        %v442 = vsel %vm416, 0.0, %v440
        %443 = vst [vmem:[%s225 + $0x48] sm:$0x3] %v442
        %s444 = ssub.s32 %s396, 1
        %v445 = vstv %s444
        %vm446 = vcmp.ge.s32.totalorder %v237, %v445
        %vm447 = vcmp.ge.s32.totalorder %v238, %v445
        %v448 = vsel %vm446, 0.0, %v394
        %v449 = vsel %vm447, 0.0, %v395
        %v452 = vrot.slane %v448, 7
        %v453 = vrot.slane %v449, 7
        %v454 = vsel %vm303, %v452, %v453
        %457 = vst [vmem:[%s225 + $0x50] sm:$0xfe] %v452
        %458 = vst [vmem:[%s225 + $0xd0] sm:$0xff] %v454
        %v459 = vld [vmem:[%s199 + $0x17] ss:$0 sm:$0xff]
        %v460 = vsel %vm263, %v394, %v459
        %v461 = vsel %vm416, 0.0, %v460
        %462 = vst [vmem:[%s225 + $0x50] sm:$0x1] %v461
        %vm463 = vcmp.ge.s32.totalorder %v238, %v415
        %v464 = vsel %vm416, 0.0, %v394
        %v465 = vsel %vm463, 0.0, %v395
        %466 = vst [vmem:[%s225 + $0x58] sm:$0xff] %v464
        %467 = vst [vmem:[%s225 + $0xd8] sm:$0xff] %v465
        %v468 = vld [vmem:[%s189 + $0x18] sm:$0xff]
        %v469 = vld [vmem:[%s189 + $0x38] sm:$0xff]
        %s470 = sld [smem:[#allocation3 + $0x3]]
        %s471 = ssub.s32 %s470, 3
        %v472 = vstv %s471
        %vm473 = vcmp.ge.s32.totalorder %v237, %v472
        %vm474 = vcmp.ge.s32.totalorder %v238, %v472
        %v475 = vsel %vm473, 0.0, %v468
        %v476 = vsel %vm474, 0.0, %v469
        %v479 = vrot.slane %v475, 5
        %v480 = vrot.slane %v476, 5
        %v481 = vsel %vm250, %v479, %v480
        %484 = vst [vmem:[%s225 + $0x60] sm:$0xf8] %v479
        %485 = vst [vmem:[%s225 + $0xe0] sm:$0xff] %v481
        %v486 = vperm.slane %v468, 0
        %v487 = vld [vmem:[%s199 + $0x18] sm:$0xe0]
        %v488 = vsel %vm263, %v486, %v487
        %v489 = vstv %s470
        %vm490 = vcmp.ge.s32.totalorder %v237, %v489
        %v492 = vrot.slane %v488, 5
        %v494 = vsel %vm490, 0.0, %v492
        %495 = vst [vmem:[%s225 + $0x60] sm:$0x7] %v494
        %s496 = ssub.s32 %s470, 2
        %v497 = vstv %s496
        %vm498 = vcmp.ge.s32.totalorder %v237, %v497
        %vm499 = vcmp.ge.s32.totalorder %v238, %v497
        %v500 = vsel %vm498, 0.0, %v468
        %v501 = vsel %vm499, 0.0, %v469
        %v504 = vrot.slane %v500, 6
        %v505 = vrot.slane %v501, 6
        %v506 = vsel %vm280, %v504, %v505
        %509 = vst [vmem:[%s225 + $0x68] sm:$0xfc] %v504
        %510 = vst [vmem:[%s225 + $0xe8] sm:$0xff] %v506
        %v511 = vld [vmem:[%s199 + $0x18] sm:$0xc0]
        %v512 = vsel %vm263, %v486, %v511
        %v514 = vrot.slane %v512, 6
        %v516 = vsel %vm490, 0.0, %v514
        %517 = vst [vmem:[%s225 + $0x68] sm:$0x3] %v516
        %s518 = ssub.s32 %s470, 1
        %v519 = vstv %s518
        %vm520 = vcmp.ge.s32.totalorder %v237, %v519
        %vm521 = vcmp.ge.s32.totalorder %v238, %v519
        %v522 = vsel %vm520, 0.0, %v468
        %v523 = vsel %vm521, 0.0, %v469
        %v526 = vrot.slane %v522, 7
        %v527 = vrot.slane %v523, 7
        %v528 = vsel %vm303, %v526, %v527
        %531 = vst [vmem:[%s225 + $0x70] sm:$0xfe] %v526
        %532 = vst [vmem:[%s225 + $0xf0] sm:$0xff] %v528
        %v533 = vld [vmem:[%s199 + $0x1f] ss:$0 sm:$0xff]
        %v534 = vsel %vm263, %v468, %v533
        %v535 = vsel %vm490, 0.0, %v534
        %536 = vst [vmem:[%s225 + $0x70] sm:$0x1] %v535
        %vm537 = vcmp.ge.s32.totalorder %v238, %v489
        %v538 = vsel %vm490, 0.0, %v468
        %v539 = vsel %vm537, 0.0, %v469
        %540 = vst [vmem:[%s225 + $0x78] sm:$0xff] %v538
        %541 = vst [vmem:[%s225 + $0xf8] sm:$0xff] %v539
        %s542 = sand.u32 %s99, 1
        %s543 = scalar_lea.sflag [#allocation6], %s542
        %s544 = sand.u32 %s99, 1
        %s545 = smul.addr %s544, 256
        %s546 = scalar_lea.vmem [#allocation9], %s545
        // Predicated region
        $region37: #{tpu_custom_call.1} parent=27 // pred_check
          %p547 = pneg %p109
        $region38: #{tpu_custom_call.1} parent=27 // pred_check_branch
          %549 = sbr.rel (%p547) target = $region40
        $region39: #{tpu_custom_call.1} parent=27 // pred_region
          %s550 = smul.u32 2, %s31
          %552 = vsyncadd %s543, 0
          %s553 = smul.addr %s550, 16
          %s554 = smul.addr %s553, 8
          %s555 = scalar_lea.hbm %s3, %s554
          %s556 = sshll.u32 %s546, 4
          %s557 = int_to_ptr.vmem [resolvable:$true] %s556
          %s558 = sshll.u32 %s555, 4
          %s559 = int_to_ptr.hbm [resolvable:$true] %s558
          %564 = dma.vmem_to_hbm [thread:$0]  %s557, 4096, %s559, %s543, 2048, 2048, 128
        $region40: #{tpu_custom_call.1} parent=27 // pred_fallthru
          _
      $region28: #{tpu_custom_call.1} parent=5 // pred_fallthru
        _
      %p565 = scmp.le.s32.totalorder 2, %s26
      // Predicated region
      $region41: #{tpu_custom_call.1} parent=5 // pred_check
        %p566 = pneg %p565
      $region42: #{tpu_custom_call.1} parent=5 // pred_check_branch
        %568 = sbr.rel (%p566) target = $region44
      $region43: #{tpu_custom_call.1} parent=5 // pred_region
        %s569 = ssub.s32 %s26, 2
        // Predicated region
        $region45: #{tpu_custom_call.1} parent=43 // pred_check
          %p570 = pneg %p115
        $region46: #{tpu_custom_call.1} parent=43 // pred_check_branch
          %572 = sbr.rel (%p570) target = $region48
        $region47: #{tpu_custom_call.1} parent=43 // pred_region
          %s573 = sand.u32 %s100, 1
          %s574 = scalar_lea.sflag [#allocation6], %s573
          %s575 = sand.u32 %s100, 1
          %s576 = smul.addr %s575, 256
          %s577 = scalar_lea.vmem [#allocation9], %s576
          %579 = dma.done %s574, 4096
        $region48: #{tpu_custom_call.1} parent=43 // pred_fallthru
          _
      $region44: #{tpu_custom_call.1} parent=5 // pred_fallthru
        _
    $region6: #{tpu_custom_call.1} parent=1 // loop_footer
      %s30 = sadd.s32 1, %s26
    $region7: #{tpu_custom_call.1} parent=1 // loop_footer_branch
      %25 = sbr.rel target = $region3
    $region8: #{tpu_custom_call.1} parent=1 // loop_exit
      _
    %580 = vsyncpa [#allocation5], 1
    %s581 = scalar_lea.sflag [#allocation5], 1
    %582 = vsyncpa %s581, 1
    %583 = vsyncpa [#allocation8], 1
    %s584 = scalar_lea.sflag [#allocation8], 1
    %585 = vsyncpa %s584, 1
    %586 = vsyncpa [#allocation6], 1
    %s587 = scalar_lea.sflag [#allocation6], 1
    %588 = vsyncpa %s587, 1

</llo_original>
